<compile_context>
chip_gen: v6e
topology: v6e:2x2x1
jax: 0.10.0
libtpu: 0.0.40
codegen_flags: <defaults>
</compile_context>

<pallas_src>
import math
from typing import Optional

import jax
import jax.numpy as jnp
from jax.experimental import pallas as pl
from jax.experimental.pallas import tpu as pltpu


def _scale_kernel(x_ref, g_ref, o_ref):
    # (tm, tw) tile of rows times a (1, tw) scale row. Pure VPU broadcast multiply;
    # promotion to the wider dtype happens in-register, then cast to the output dtype.
    o_ref[...] = (x_ref[...] * g_ref[...]).astype(o_ref.dtype)


def _pad_to(v: int, m: int) -> int:
    return ((v + m - 1) // m) * m


def layer_scaler(
    x: jax.Array,
    gamma: jax.Array,
    *,
    out_dtype: Optional[jnp.dtype] = None,
    vmem_budget_bytes: int = 20 << 20,   # total double-buffered (in + out) block footprint
    min_pallas_bytes: int = 1 << 20,     # below this, plain XLA multiply wins
) -> jax.Array:
    """y = x * gamma, with gamma of shape (C,) broadcast over the last axis of x."""
    orig_shape = x.shape
    C = orig_shape[-1]
    assert gamma.shape == (C,), f"gamma must have shape ({C},), got {gamma.shape}"

    if out_dtype is None:
        # PyTorch semantics: result dtype of `x * gamma`.
        out_dtype = jnp.result_type(x.dtype, gamma.dtype)
    out_dtype = jnp.dtype(out_dtype)
    gamma = gamma.astype(out_dtype)

    # Tiny input: pallas_call / DMA setup overhead dwarfs a few-KiB elementwise op.
    if x.size * x.dtype.itemsize < min_pallas_bytes:
        return (x * gamma).astype(out_dtype)

    N = x.size
    lane_base = (C * 128) // math.gcd(C, 128)   # lcm(C, 128)

    if N % lane_base == 0:
        # Fully lane-dense: W is a multiple of both C and 128 -> full vregs, unmasked vst.
        # Since W % C == 0, flat element k has channel k % C, so gamma tiled W//C times
        # reproduces the original per-channel broadcast exactly.
        W = lane_base
        while W * 2 <= 2048 and N % (W * 2) == 0:
            W *= 2
    else:
        # Lane-densify best effort: widest k*C <= 2048 that divides N (gamma tiled k times).
        # Falls back to W = C only when no wider divisor exists.
        rows_total = N // C
        k_best = 1
        k_cap = min(rows_total, max(1, 2048 // C))
        for k in range(k_cap, 0, -1):
            if rows_total % k == 0:
                k_best = k
                break
        W = k_best * C

    x2 = x.reshape(-1, W)
    g2 = jnp.tile(gamma, W // C).reshape(1, W)
    rows = x2.shape[0]

    in_item = x.dtype.itemsize
    out_item = out_dtype.itemsize
    bpe = in_item + out_item                    # streamed bytes per element (read + write)
    W_pad = _pad_to(W, 128)                     # VMEM lane padding

    # --- column tiling: only needed when a single 8-row stripe already busts the budget
    tw = W
    min_rows = min(8, rows)
    if 2 * min_rows * W_pad * bpe > vmem_budget_bytes:
        tw = max(128, (vmem_budget_bytes // (2 * min_rows * bpe)) // 128 * 128)
        tw = min(tw, W)
    tw_pad = _pad_to(tw, 128)

    # --- row tiling from the *padded* double-buffered footprint
    if rows <= 8:
        tm = rows
    else:
        tm = vmem_budget_bytes // (2 * tw_pad * bpe)
        tm = min(tm, rows, pl.cdiv(rows, 2))    # >= 2 grid steps so megacore can shard
        tm = max(8, tm - tm % 8)                # sublane-aligned blocks

    row_steps = pl.cdiv(rows, tm)
    col_steps = pl.cdiv(W, tw)

    # --- v7x megacore balance: small odd grids waste ~1/steps of one TC; nudge to even.
    if col_steps == 1 and rows > 8 and row_steps % 2 == 1 and 3 <= row_steps <= 15:
        tm_cand = _pad_to(pl.cdiv(rows, row_steps + 1), 8)
        if pl.cdiv(rows, tm_cand) % 2 == 0:
            tm = tm_cand
            row_steps = pl.cdiv(rows, tm)

    # --- scoped-VMEM limit: padded blocks, double-buffered x + out, plus resident gamma row.
    footprint = (2 * _pad_to(tm, 8) * tw_pad * bpe
                 + 2 * 8 * tw_pad * out_item)
    # 32 MiB is >= footprint + headroom for the default budget, raises v5e's 16 MiB scoped
    # default so the bigger blocks compile there, and stays within v7x's 64 MiB physical VMEM.
    vmem_limit = max(32 << 20, footprint + (4 << 20))

    out = pl.pallas_call(
        _scale_kernel,
        out_shape=jax.ShapeDtypeStruct((rows, W), out_dtype),
        grid=(row_steps, col_steps),
        in_specs=[
            pl.BlockSpec((tm, tw), lambda i, j: (i, j)),
            pl.BlockSpec((1, tw), lambda i, j: (0, j)),   # gamma row resident across rows
        ],
        out_specs=pl.BlockSpec((tm, tw), lambda i, j: (i, j)),
        compiler_params=pltpu.CompilerParams(
            dimension_semantics=("parallel", "parallel"),
            vmem_limit_bytes=vmem_limit,
        ),
    )(x2, g2)

    return out.reshape(orig_shape)


if __name__ == "__main__":
    # Module init: gamma = init_value * ones((channels,))
    init_value = 1e-2
    key = jax.random.PRNGKey(0)
    k1, k2, k3, k4 = jax.random.split(key, 4)

    def check(x, gamma, **kw):
        y = jax.block_until_ready(layer_scaler(x, gamma, **kw))
        y_ref = x * gamma   # reference broadcast multiply (same promotion rules)
        assert y.shape == x.shape
        assert y.dtype == y_ref.dtype
        assert jnp.allclose(y.astype(jnp.float32), y_ref.astype(jnp.float32),
                            atol=1e-5, rtol=1e-5)
        return y

    C = 32
    gamma32 = init_value * jnp.ones((C,), dtype=jnp.float32)

    # 1) Module-sized input (batch=2, seq=8, channels=32): small-input XLA path.
    x_small = jax.random.normal(k1, (2, 8, C), dtype=jnp.float32)
    check(x_small, gamma32)

    # 2) Same tiny input forced through the Pallas lane-dense path.
    check(x_small, gamma32, min_pallas_bytes=0)

    # 3) Modest input: lane-dense path, multi-step (even) parallel grid.
    x_med = jax.random.normal(k2, (2, 32, 32, C), dtype=jnp.float32)
    check(x_med, gamma32, min_pallas_bytes=0)

    # 4) Odd channel count (40): lane-densified fallback (rows widened to k*C).
    C2 = 40
    gamma40 = init_value * jnp.ones((C2,), dtype=jnp.float32)
    x_fb = jax.random.normal(k3, (3, 7, C2), dtype=jnp.float32)
    check(x_fb, gamma40, min_pallas_bytes=0)

    # 5) bf16 activations + f32 gamma: default promotion matches PyTorch (f32 result).
    x_bf16 = jax.random.normal(k4, (2, 32, 32, C), dtype=jnp.bfloat16)
    check(x_bf16, gamma32, min_pallas_bytes=0)

    # 6) Optional relaxed out_dtype (bf16 output halves store traffic on the HBM-bound path).
    y_bf16 = jax.block_until_ready(
        layer_scaler(x_bf16, gamma32, out_dtype=jnp.bfloat16, min_pallas_bytes=0))
    ref_bf16 = x_bf16 * gamma32.astype(jnp.bfloat16)
    assert y_bf16.dtype == jnp.bfloat16
    assert jnp.allclose(y_bf16.astype(jnp.float32), ref_bf16.astype(jnp.float32),
                        atol=1e-2, rtol=1e-2)

    print("KERNEL_OK")
</pallas_src>

<mosaic_0001>
module attributes {stable_mosaic.version = 11 : i64} {
  func.func @_scale_kernel(%arg0: i32, %arg1: i32, %arg2: memref<1x512xf32, #tpu.memory_space<vmem>>, %arg3: memref<1x512xf32, #tpu.memory_space<vmem>>, %arg4: memref<1x512xf32, #tpu.memory_space<vmem>>) attributes {dimension_semantics = [#tpu.dimension_semantics<parallel>, #tpu.dimension_semantics<parallel>], iteration_bounds = array<i64: 1, 1>, scalar_prefetch = 0 : i64, scratch_operands = 0 : i64, tpu.core_type = #tpu.core_type<tc>, window_params = [{transform_indices = @transform_0, window_bounds = array<i64: 1, 512>}, {transform_indices = @transform_1, window_bounds = array<i64: 1, 512>}, {transform_indices = @transform_2, window_bounds = array<i64: 1, 512>}]} {
    %c0 = arith.constant 0 : index
    %c0_0 = arith.constant 0 : index
    %0 = vector.load %arg2[%c0, %c0_0] : memref<1x512xf32, #tpu.memory_space<vmem>>, vector<1x512xf32>
    %c0_1 = arith.constant 0 : index
    %c0_2 = arith.constant 0 : index
    %1 = vector.load %arg3[%c0_1, %c0_2] : memref<1x512xf32, #tpu.memory_space<vmem>>, vector<1x512xf32>
    %2 = arith.mulf %0, %1 : vector<1x512xf32>
    %c0_3 = arith.constant 0 : index
    %c0_4 = arith.constant 0 : index
    %3 = vector.load %arg4[%c0_3, %c0_4] : memref<1x512xf32, #tpu.memory_space<vmem>>, vector<1x512xf32>
    tpu.vector_store %arg4[%c0_3, %c0_4], %2 {strides = array<i32>} : memref<1x512xf32, #tpu.memory_space<vmem>>, vector<1x512xf32>,
    return
  }
  func.func @transform_0(%arg0: i32, %arg1: i32) -> (i32, i32) {
    %c0_i32 = arith.constant 0 : i32
    return %arg0, %arg1 : i32, i32
  }
  func.func @transform_1(%arg0: i32, %arg1: i32) -> (i32, i32) {
    %c0_i32 = arith.constant 0 : i32
    %c0_i32_0 = arith.constant 0 : i32
    return %c0_i32, %arg1 : i32, i32
  }
  func.func @transform_2(%arg0: i32, %arg1: i32) -> (i32, i32) {
    %c0_i32 = arith.constant 0 : i32
    return %arg0, %arg1 : i32, i32
  }
}

</mosaic_0001>

<llo_original>
// kernel: tpu_custom_call.1
$region0: #{tpu_custom_call.1}
  #allocation0 [shape = 'u32[]', space=smem, size = 0x4, offset = 0x4, fixed_abs, tag = 'smem constant byte address 0x4 - core index']
  #allocation1 [shape = 'u32[144,128]{1,0:T(1,128)}', space=vmem, size = 0x12000, scoped, tag = 'internal scratch']
  %s0 = inlined_call_operand.hbm [shape: f32[1,512], index: 0, kind: input, shape index: {}]
  %s1 = inlined_call_operand.hbm [shape: f32[1,512], index: 1, kind: input, shape index: {}]
  %s2 = inlined_call_operand.hbm [shape: f32[1,512], index: 2, kind: output, shape index: {}]
  %s3 = sld [smem:[#allocation0]]
  $region26: #{tpu_custom_call.1} parent=0
    _
  %s5 = ssub.s32 1, %s3
  %s6 = scalar_select 0, %s5, %s3
  $region1: #{tpu_custom_call.1} parent=0
    #allocation2 [shape = 'u8[2048]{0}', space=vmem, size = 0x800, scoped, tag = 'input window, operand 0, single buffered']
    #allocation3 [shape = 's32[1]{0}', space=sflag, size = 0x4, scoped, tag = 'scoped memory for tpu_custom_call.1']
    #allocation4 [shape = 's32[1]{0}', space=sflag, size = 0x4, scoped, tag = 'scoped memory for tpu_custom_call.1']
    #allocation5 [shape = 'u8[2048]{0}', space=vmem, size = 0x800, scoped, tag = 'input window, operand 1, single buffered']
    #allocation6 [shape = 's32[1]{0}', space=sflag, size = 0x4, scoped, tag = 'scoped memory for tpu_custom_call.1']
    #allocation7 [shape = 'u8[2048]{0}', space=vmem, size = 0x800, scoped, tag = 'output window, operand 0, single buffered']
    %7 = vsyncpa [#allocation3], 0
    %8 = vsyncpa [#allocation6], 0
    %9 = vsyncpa [#allocation4], 0
    // Predicated region
    $region2: #{tpu_custom_call.1} parent=1 // pred_check
      _
    $region3: #{tpu_custom_call.1} parent=1 // pred_check_branch
      %11 = sbr.rel (0) target = $region5
    $region4: #{tpu_custom_call.1} parent=1 // pred_region
      %s13 = ssub.s32 64, 64
      %14 = vsyncadd [#allocation3], %s13
      %s16 = sshll.u32 [#allocation2], 4
      %s17 = int_to_ptr.vmem [resolvable:$true] %s16
      %19 = dma.hbm_to_vmem [thread:$0]  %s0, 64, %s17, [#allocation3]
    $region5: #{tpu_custom_call.1} parent=1 // pred_fallthru
      _
    // Predicated region
    $region6: #{tpu_custom_call.1} parent=1 // pred_check
      _
    $region7: #{tpu_custom_call.1} parent=1 // pred_check_branch
      %21 = sbr.rel (0) target = $region9
    $region8: #{tpu_custom_call.1} parent=1 // pred_region
      %s23 = ssub.s32 64, 64
      %24 = vsyncadd [#allocation6], %s23
      %s26 = sshll.u32 [#allocation5], 4
      %s27 = int_to_ptr.vmem [resolvable:$true] %s26
      %29 = dma.hbm_to_vmem [thread:$0]  %s1, 64, %s27, [#allocation6]
    $region9: #{tpu_custom_call.1} parent=1 // pred_fallthru
      _
    // Predicated region
    $region10: #{tpu_custom_call.1} parent=1 // pred_check
      _
    $region11: #{tpu_custom_call.1} parent=1 // pred_check_branch
      %31 = sbr.rel (0) target = $region13
    $region12: #{tpu_custom_call.1} parent=1 // pred_region
      %32 = dma.done [#allocation3], 64
    $region13: #{tpu_custom_call.1} parent=1 // pred_fallthru
      _
    // Predicated region
    $region14: #{tpu_custom_call.1} parent=1 // pred_check
      _
    $region15: #{tpu_custom_call.1} parent=1 // pred_check_branch
      %34 = sbr.rel (0) target = $region17
    $region16: #{tpu_custom_call.1} parent=1 // pred_region
      %35 = dma.done [#allocation6], 64
    $region17: #{tpu_custom_call.1} parent=1 // pred_fallthru
      _
    %v36 = vld [vmem:[#allocation2] sm:$0xf]
    %v37 = vld [vmem:[#allocation5] sm:$0xf]
    %v38 = vmul.f32 %v36, %v37
    %v39 = vlaneseq
    %vm40 = vcmp.ge.s32.totalorder %v39, 0
    %vm41 = vcmp.lt.s32.totalorder %v39, 512
    %vm42 = vmand %vm40, %vm41
    %43 = vst.msk [vmem:[#allocation7] sm:$0xf] %vm42, %v38
    // Predicated region
    $region18: #{tpu_custom_call.1} parent=1 // pred_check
      _
    $region19: #{tpu_custom_call.1} parent=1 // pred_check_branch
      %45 = sbr.rel (0) target = $region21
    $region20: #{tpu_custom_call.1} parent=1 // pred_region
      %s47 = ssub.s32 64, 64
      %48 = vsyncadd [#allocation4], %s47
      %s50 = sshll.u32 [#allocation7], 4
      %s51 = int_to_ptr.vmem [resolvable:$true] %s50
      %53 = dma.vmem_to_hbm [thread:$0]  %s51, 64, %s2, [#allocation4]
    $region21: #{tpu_custom_call.1} parent=1 // pred_fallthru
      _
    // Predicated region
    $region22: #{tpu_custom_call.1} parent=1 // pred_check
      _
    $region23: #{tpu_custom_call.1} parent=1 // pred_check_branch
      %55 = sbr.rel (0) target = $region25
    $region24: #{tpu_custom_call.1} parent=1 // pred_region
      %56 = dma.done [#allocation4], 64
    $region25: #{tpu_custom_call.1} parent=1 // pred_fallthru
      _
    %57 = vsyncpa [#allocation3], 1
    %58 = vsyncpa [#allocation6], 1
    %59 = vsyncpa [#allocation4], 1

</llo_original>
